<compile_context>
chip_gen: v7x
topology: tpu7x:2x2x1
jax: 0.10.0
libtpu: 0.0.40
codegen_flags: <defaults>
</compile_context>

<pallas_src>
import jax
import jax.numpy as jnp
from jax.experimental import pallas as pl
from jax.experimental.pallas import tpu as pltpu


def _round_up(x, m):
    return ((x + m - 1) // m) * m


def _apply_activation(a, activation):
    """Element-wise forward activation, computed in float32."""
    if activation == "tanh":
        return jnp.tanh(a)
    elif activation == "relu":
        return jnp.maximum(a, 0.0)
    elif activation == "cap_relu":
        return jnp.clip(a, 0.0, 1.0)
    elif activation == "linear":
        return a
    elif activation == "leakyrelu":
        # AbstractLayer uses F.leaky_relu(x, 0.2)
        return jnp.where(a >= 0.0, a, 0.2 * a)
    elif activation == "sigmoid":
        return jax.nn.sigmoid(a)
    else:
        raise ValueError(f"Unsupported activation {activation}")


def _vmem_cap_bytes():
    """Per-generation VMEM cap: ~75% of physical (48 MiB v7x, 96 MiB v5e/v6e)."""
    phys = 64 << 20  # v7x-safe default if the query is unavailable
    try:
        info = pltpu.get_tpu_info()
        phys = int(getattr(info, "vmem_capacity_bytes", phys))
    except Exception:
        pass
    return max(16 << 20, int(phys * 0.75))


def _make_kernel(activation, use_bias, acc_mode):
    """acc_mode: 'none' (single k step), 'output' (accumulate in f32 o_ref),
    'scratch' (f32 VMEM accumulator for non-f32 outputs)."""

    def kernel(*refs):
        if use_bias:
            x_ref, w_ref, b_ref = refs[:3]
            rest = refs[3:]
        else:
            x_ref, w_ref = refs[:2]
            b_ref = None
            rest = refs[2:]
        if acc_mode == "scratch":
            o_ref, acc_ref = rest
        else:
            (o_ref,) = rest
            acc_ref = o_ref  # resident output block doubles as accumulator

        # x tile (tm, tk) contracted with W tile (tn, tk) along their last
        # axes -> (tm, tn).  Equivalent to x @ W.T without materializing W.T
        # (no XLU transpose; W stays lane-dense in its native layout).
        partial = jax.lax.dot_general(
            x_ref[...],
            w_ref[...],
            dimension_numbers=(((1,), (1,)), ((), ())),
            preferred_element_type=jnp.float32,
        )

        def finalize(a_f32):
            if use_bias:
                a_f32 = a_f32 + b_ref[...]  # (1, tn) f32 broadcasts
            h = _apply_activation(a_f32, activation)
            o_ref[...] = h.astype(o_ref.dtype)

        if acc_mode == "none":
            finalize(partial)
        else:
            k = pl.program_id(2)

            @pl.when(k == 0)
            def _init():
                # Write directly: no zero-fill + read-modify-write pass.
                acc_ref[...] = partial.astype(acc_ref.dtype)

            @pl.when(k > 0)
            def _accum():
                acc_ref[...] = acc_ref[...] + partial.astype(acc_ref.dtype)

            @pl.when(k == pl.num_programs(2) - 1)
            def _finish():
                finalize(acc_ref[...].astype(jnp.float32))

    return kernel


def prepare_layer_params(weights, bias=None, *, mxu_dtype=jnp.bfloat16,
                         block_n=512, block_k=512):
    """One-time (init) prep: cast W to the MXU dtype and pad W/bias to the
    tile grid so the per-call hot path never touches the weight stream."""
    N, K = weights.shape
    tn = min(block_n, _round_up(N, 128))
    tk = min(block_k, _round_up(K, 128))
    # Guarantee >= 2 blocks along the parallel N axis (keeps both v7x
    # TensorCores busy when the layer fits in a single tile).
    if _round_up(N, tn) // tn == 1 and tn >= 256 and tn % 256 == 0:
        tn //= 2
    Np, Kp = _round_up(N, tn), _round_up(K, tk)

    w = weights if mxu_dtype is None else weights.astype(mxu_dtype)
    if (Np, Kp) != (N, K):
        # Zero padding along K is exact for the dot; padded N columns are
        # sliced off after the call.
        w = jnp.pad(w, ((0, Np - N), (0, Kp - K)))

    b_row = None
    if bias is not None:
        b_row = bias.astype(jnp.float32).reshape(1, N)
        if Np != N:
            b_row = jnp.pad(b_row, ((0, 0), (0, Np - N)))

    return {"w": w, "b": b_row, "n": N, "k": K, "tn": tn, "tk": tk,
            "mxu_dtype": mxu_dtype}


def abstract_layer_forward(x, params, activation="tanh", *, block_b=512):
    """Pallas equivalent of AbstractLayer.forward (returns nonlinear activations).

    x:      (B, in_features)
    params: output of prepare_layer_params(weights, bias, ...)
    """
    B, K = x.shape
    assert K == params["k"], "x last dim must match weight in_features"
    w = params["w"]
    b_row = params["b"]
    N, tn, tk = params["n"], params["tn"], params["tk"]
    Np, Kp = w.shape
    use_bias = b_row is not None
    out_dtype = x.dtype
    mxu_dtype = params["mxu_dtype"]

    if mxu_dtype is not None and x.dtype != jnp.dtype(mxu_dtype):
        x = x.astype(mxu_dtype)

    # Batch tile: sublane-aligned; primary arithmetic-intensity knob.
    tm = min(block_b, _round_up(B, 8))
    Bp = _round_up(B, tm)
    if (Bp, Kp) != (B, K):
        # Only x needs per-call padding, and only when genuinely ragged.
        x = jnp.pad(x, ((0, Bp - B), (0, Kp - K)))

    nk = Kp // tk
    if nk == 1:
        acc_mode = "none"
    elif jnp.dtype(out_dtype) == jnp.dtype(jnp.float32):
        acc_mode = "output"   # accumulate straight into the resident o_ref
    else:
        acc_mode = "scratch"

    grid = (Bp // tm, Np // tn, nk)

    in_specs = [
        pl.BlockSpec((tm, tk), lambda i, j, k: (i, k)),   # x tile
        pl.BlockSpec((tn, tk), lambda i, j, k: (j, k)),   # W tile (native layout)
    ]
    operands = [x, w]
    if use_bias:
        in_specs.append(pl.BlockSpec((1, tn), lambda i, j, k: (0, j)))
        operands.append(b_row)
    out_specs = pl.BlockSpec((tm, tn), lambda i, j, k: (i, j))

    scratch_shapes = []
    if acc_mode == "scratch":
        scratch_shapes.append(pltpu.VMEM((tm, tn), jnp.float32))

    # VMEM budget: double-buffered inputs + output block (+ optional f32 acc).
    x_b = jnp.dtype(x.dtype).itemsize
    w_b = jnp.dtype(w.dtype).itemsize
    o_b = jnp.dtype(out_dtype).itemsize
    need = 2 * (tm * tk * x_b + tn * tk * w_b) + 2 * tm * tn * o_b
    if use_bias:
        need += 2 * tn * 4
    if acc_mode == "scratch":
        need += tm * tn * 4
    vmem_limit = min(max(int(need * 1.5) + (4 << 20), 16 << 20), _vmem_cap_bytes())

    transcendentals = B * N if activation in ("tanh", "sigmoid") else 0
    cost = pl.CostEstimate(
        flops=2 * B * N * K,
        transcendentals=transcendentals,
        bytes_accessed=(B * K * x_b + N * K * w_b + B * N * o_b
                        + (N * 4 if use_bias else 0)),
    )

    out = pl.pallas_call(
        _make_kernel(activation, use_bias, acc_mode),
        out_shape=jax.ShapeDtypeStruct((Bp, Np), out_dtype),
        grid=grid,
        in_specs=in_specs,
        out_specs=out_specs,
        scratch_shapes=scratch_shapes,
        compiler_params=pltpu.CompilerParams(
            dimension_semantics=("parallel", "parallel", "arbitrary"),
            vmem_limit_bytes=vmem_limit,
        ),
        cost_estimate=cost,
    )(*operands)

    if (Bp, Np) != (B, N):
        out = out[:B, :N]
    return out


def init_orthogonal_weights(key, out_features, in_features, dtype=jnp.float32):
    """Deterministic analogue of nn.init.orthogonal_ with gain sqrt(6/(fan_in+fan_out))."""
    gain = jnp.sqrt(6.0 / (in_features + out_features))
    rows, cols = out_features, in_features
    flat = jax.random.normal(key, (max(rows, cols), min(rows, cols)), dtype=jnp.float32)
    q, r = jnp.linalg.qr(flat)
    d = jnp.sign(jnp.diagonal(r))
    q = q * d[None, :]
    if rows < cols:
        q = q.T
    return (gain * q[:rows, :cols]).astype(dtype)


def reference_forward(x, weights, bias, activation="tanh"):
    a = jax.lax.dot_general(
        x, weights,
        dimension_numbers=(((1,), (1,)), ((), ())),
        precision=jax.lax.Precision.HIGHEST,
    )
    if bias is not None:
        a = a + bias[None, :]
    return _apply_activation(a, activation)


# TODO(synk): the torch module also caches self.linearactivations / self.activations
# as stateful attributes and defines autograd-based update helpers
# (compute_forward_gradients, compute_bp_update, save_logs, ...); those have no
# in-kernel equivalent here -- the kernel implements the forward math only.


if __name__ == "__main__":
    key = jax.random.PRNGKey(0)
    k_x, k_w, k_x2, k_w2 = jax.random.split(key, 4)

    # Case 1: tanh + bias, default bf16 MXU operands (f32 accumulation).
    B, in_f, out_f = 8, 256, 256
    x = jax.random.normal(k_x, (B, in_f), dtype=jnp.float32)
    weights = init_orthogonal_weights(k_w, out_f, in_f)
    bias = jnp.zeros((out_f,), dtype=jnp.float32)  # nn.init.constant_(bias, 0)

    params_bf16 = prepare_layer_params(weights, bias)  # bf16 cast + pad done ONCE
    out = abstract_layer_forward(x, params_bf16, activation="tanh")
    out = jax.block_until_ready(out)
    ref = reference_forward(x, weights, bias, activation="tanh")
    assert out.shape == (B, out_f)
    assert jnp.allclose(out, ref, atol=3e-2, rtol=3e-2), "tanh+bias (bf16 MXU) mismatch"

    # Case 1b: same layer with full f32 operands -> tight tolerance.
    params_f32 = prepare_layer_params(weights, bias, mxu_dtype=None)
    out_f32 = jax.block_until_ready(
        abstract_layer_forward(x, params_f32, activation="tanh"))
    assert jnp.allclose(out_f32, ref, atol=2e-3, rtol=2e-3), "tanh+bias (f32) mismatch"

    # Case 2: no bias, leakyrelu, non-aligned shapes (exercises padding + N split).
    B2, in2, out2 = 5, 100, 200
    x2 = jax.random.normal(k_x2, (B2, in2), dtype=jnp.float32)
    w2 = init_orthogonal_weights(k_w2, out2, in2)
    params2 = prepare_layer_params(w2, None, mxu_dtype=None)
    got2 = jax.block_until_ready(
        abstract_layer_forward(x2, params2, activation="leakyrelu"))
    ref2 = reference_forward(x2, w2, None, activation="leakyrelu")
    assert got2.shape == (B2, out2)
    assert jnp.allclose(got2, ref2, atol=2e-3, rtol=2e-3), "leakyrelu/no-bias mismatch"

    # Case 3: small block_k forces a multi-step K reduction (accumulate-in-output path).
    params3 = prepare_layer_params(weights, bias, mxu_dtype=None, block_k=128)
    got3 = jax.block_until_ready(
        abstract_layer_forward(x, params3, activation="sigmoid"))
    ref3 = reference_forward(x, weights, bias, activation="sigmoid")
    assert jnp.allclose(got3, ref3, atol=2e-3, rtol=2e-3), "multi-K accumulation mismatch"

    print("KERNEL_OK")
</pallas_src>

<mosaic_0001>
module attributes {stable_mosaic.version = 11 : i64} {
  func.func @kernel(%arg0: i32, %arg1: i32, %arg2: i32, %arg3: memref<8x256xbf16, #tpu.memory_space<vmem>>, %arg4: memref<128x256xbf16, #tpu.memory_space<vmem>>, %arg5: memref<1x128xf32, #tpu.memory_space<vmem>>, %arg6: memref<8x128xf32, #tpu.memory_space<vmem>>) attributes {dimension_semantics = [#tpu.dimension_semantics<parallel>, #tpu.dimension_semantics<parallel>, #tpu.dimension_semantics<arbitrary>], iteration_bounds = array<i64: 1, 2, 1>, scalar_prefetch = 0 : i64, scratch_operands = 0 : i64, tpu.core_type = #tpu.core_type<tc>, window_params = [{transform_indices = @transform_0, window_bounds = array<i64: 8, 256>}, {transform_indices = @transform_1, window_bounds = array<i64: 128, 256>}, {transform_indices = @transform_2, window_bounds = array<i64: 1, 128>}, {transform_indices = @transform_3, window_bounds = array<i64: 8, 128>}]} {
    %c0 = arith.constant 0 : index
    %c0_0 = arith.constant 0 : index
    %0 = vector.load %arg3[%c0, %c0_0] : memref<8x256xbf16, #tpu.memory_space<vmem>>, vector<8x256xbf16>
    %c0_1 = arith.constant 0 : index
    %c0_2 = arith.constant 0 : index
    %1 = vector.load %arg4[%c0_1, %c0_2] : memref<128x256xbf16, #tpu.memory_space<vmem>>, vector<128x256xbf16>
    %cst = arith.constant dense<0.000000e+00> : vector<8x128xf32>
    %2 = tpu.matmul %0, %1, %cst {dimension_numbers = #tpu.dot_dimension_numbers<[1], [1], [0], [0], [0, 0, 1, 0], [], []>} : vector<8x256xbf16>, vector<128x256xbf16>, vector<8x128xf32> -> vector<8x128xf32>
    %c0_3 = arith.constant 0 : index
    %c0_4 = arith.constant 0 : index
    %3 = vector.load %arg5[%c0_3, %c0_4] : memref<1x128xf32, #tpu.memory_space<vmem>>, vector<1x128xf32>
    %4 = vector.broadcast %3 : vector<1x128xf32> to vector<8x128xf32>
    %5 = arith.addf %2, %4 : vector<8x128xf32>
    %6 = math.tanh %5 : vector<8x128xf32>
    %c0_5 = arith.constant 0 : index
    %c0_6 = arith.constant 0 : index
    %7 = vector.load %arg6[%c0_5, %c0_6] : memref<8x128xf32, #tpu.memory_space<vmem>>, vector<8x128xf32>
    tpu.vector_store %arg6[%c0_5, %c0_6], %6 {strides = array<i32>} : memref<8x128xf32, #tpu.memory_space<vmem>>, vector<8x128xf32>,
    return
  }
  func.func @transform_0(%arg0: i32, %arg1: i32, %arg2: i32) -> (i32, i32) {
    %c0_i32 = arith.constant 0 : i32
    return %arg0, %arg2 : i32, i32
  }
  func.func @transform_1(%arg0: i32, %arg1: i32, %arg2: i32) -> (i32, i32) {
    %c0_i32 = arith.constant 0 : i32
    return %arg1, %arg2 : i32, i32
  }
  func.func @transform_2(%arg0: i32, %arg1: i32, %arg2: i32) -> (i32, i32) {
    %c0_i32 = arith.constant 0 : i32
    %c0_i32_0 = arith.constant 0 : i32
    return %c0_i32, %arg1 : i32, i32
  }
  func.func @transform_3(%arg0: i32, %arg1: i32, %arg2: i32) -> (i32, i32) {
    %c0_i32 = arith.constant 0 : i32
    return %arg0, %arg1 : i32, i32
  }
}

</mosaic_0001>

<llo_original>
// kernel: tpu_custom_call.1
$region0: #{tpu_custom_call.1}
  #allocation0 [shape = 'u32[]', space=smem, size = 0x4, offset = 0x4, fixed_abs, tag = 'smem constant byte address 0x4 - core index']
  #allocation1 [shape = 'u32[144,128]{1,0:T(1,128)}', space=vmem, size = 0x12000, scoped, tag = 'internal scratch']
  %s0 = inlined_call_operand.hbm [shape: bf16[8,256], index: 0, kind: input, shape index: {}]
  %s1 = inlined_call_operand.hbm [shape: bf16[256,256], index: 1, kind: input, shape index: {}]
  %s2 = inlined_call_operand.vmem [shape: f32[1,256], index: 2, kind: input, shape index: {}]
  %s3 = inlined_call_operand.hbm [shape: f32[8,256], index: 3, kind: output, shape index: {}]
  %s4 = sld [smem:[#allocation0]]
  $region53: #{tpu_custom_call.1} parent=0
    _
  %s6 = ssub.s32 1, %s4
  %s7 = scalar_select 0, %s6, %s4
  $region1: #{tpu_custom_call.1} parent=0
    #allocation2 [shape = 'u8[4096]{0}', space=vmem, size = 0x1000, scoped, tag = 'input window, operand 0, single buffered']
    #allocation3 [shape = 's32[2]{0}', space=sflag, size = 0x8, scoped, tag = 'scoped memory for tpu_custom_call.1']
    #allocation4 [shape = 's32[2]{0}', space=sflag, size = 0x8, scoped, tag = 'scoped memory for tpu_custom_call.1']
    #allocation5 [shape = 'u8[131072]{0}', space=vmem, size = 0x20000, scoped, tag = 'input window, operand 1']
    #allocation6 [shape = 's32[2]{0}', space=sflag, size = 0x8, scoped, tag = 'scoped memory for tpu_custom_call.1']
    #allocation7 [shape = 'u8[8192]{0}', space=vmem, size = 0x2000, scoped, tag = 'output window, operand 0']
    %8 = vsyncpa [#allocation3], 0
    %9 = vsyncpa [#allocation6], 0
    %s10 = scalar_lea.sflag [#allocation6], 1
    %11 = vsyncpa %s10, 0
    %12 = vsyncpa [#allocation4], 0
    %s13 = scalar_lea.sflag [#allocation4], 1
    %14 = vsyncpa %s13, 0
    loop: start=0, step=1, limit=4
    $region2: #{tpu_custom_call.1} parent=1 // loop_pre_header
      _
    $region3: #{tpu_custom_call.1} parent=1 // loop_header
      %s16 = sphi 0, %s20
      %p17 = scmp.ge.s32.totalorder %s16, 4
      %s23 = sphi 0, %s42
      %s24 = sphi 0, %s38
      %s25 = sphi 0, %s34
      %s26 = sphi 0, %s23
      %s27 = sphi 0, %s24
      %s28 = sphi 0, %s25
      %s29 = sphi 0, %s26
      %s30 = sphi 0, %s27
      %s31 = sphi 0, %s28
      %s47 = sphi 0, %s49
      %s50 = sphi 0, %s47
      %s51 = sphi 0, %s50
      %s67 = sphi 0, %s51
      %s75 = sphi 0, %s77
      %s78 = sphi 0, %s75
      %s79 = sphi 0, %s78
      %s95 = sphi 0, %s79
      %s101 = sphi 0, %s103
      %s104 = sphi 0, %s101
      %s105 = sphi 0, %s104
      %s121 = sphi 0, %s105
      %s129 = sphi 0, %s131
      %s132 = sphi 0, %s129
      %s133 = sphi 0, %s132
      %s149 = sphi 0, %s133
    $region4: #{tpu_custom_call.1} parent=1 // loop_header_branch
      %19 = sbr.rel (%p17) target = $region8
    $region5: #{tpu_custom_call.1} parent=1 // loop_body
      %s21 = ssub.s32 %s16, 1
      %s22 = ssub.s32 %s16, 2
      %s32 = sadd.s32 1, %s25
      %p33 = scmp.ge.s32.totalorder %s32, 1
      %s34 = scalar_select %p33, 0, %s32
      %s35 = sadd.s32 1, %s24
      %s36 = scalar_select %p33, %s35, %s24
      %p37 = scmp.ge.s32.totalorder %s36, 2
      %s38 = scalar_select %p37, 0, %s36
      %s39 = sadd.s32 1, %s23
      %s40 = scalar_select %p37, %s39, %s23
      %p41 = scmp.ge.s32.totalorder %s40, 1
      %s42 = scalar_select %p41, 0, %s40
      %s43 = ssub.s32 %s23, %s42
      %s44 = ssub.s32 %s25, %s34
      %s45 = sor.u32 %s43, %s44
      %p46 = scmp.eq.s32.totalorder %s45, 0
      %s48 = sadd.s32 %s47, 1
      %s49 = scalar_select %p46, %s47, %s48
      %p52 = pneg %p46
      %p53 = scmp.eq.s32.totalorder %s16, 1
      %p54 = por %p52, %p53
      %p55 = scmp.ne.s32.totalorder %s47, %s50
      %p56 = scmp.eq.s32.totalorder %s16, 0
      %p57 = por %p55, %p56
      %p58 = scmp.ne.s32.totalorder %s47, %s50
      %p59 = scmp.eq.s32.totalorder %s21, 1
      %p60 = por %p58, %p59
      %p61 = scmp.ne.s32.totalorder %s50, %s51
      %p62 = scmp.eq.s32.totalorder %s21, 0
      %p63 = por %p61, %p62
      %p64 = scmp.ne.s32.totalorder %s50, %s51
      %p65 = scmp.eq.s32.totalorder %s22, 1
      %p66 = por %p64, %p65
      %p68 = scmp.ne.s32.totalorder %s51, %s67
      %p69 = scmp.eq.s32.totalorder %s22, 0
      %p70 = por %p68, %p69
      %s71 = ssub.s32 %s24, %s38
      %s72 = ssub.s32 %s25, %s34
      %s73 = sor.u32 %s71, %s72
      %p74 = scmp.eq.s32.totalorder %s73, 0
      %s76 = sadd.s32 %s75, 1
      %s77 = scalar_select %p74, %s75, %s76
      %p80 = pneg %p74
      %p81 = scmp.eq.s32.totalorder %s16, 1
      %p82 = por %p80, %p81
      %p83 = scmp.ne.s32.totalorder %s75, %s78
      %p84 = scmp.eq.s32.totalorder %s16, 0
      %p85 = por %p83, %p84
      %p86 = scmp.ne.s32.totalorder %s75, %s78
      %p87 = scmp.eq.s32.totalorder %s21, 1
      %p88 = por %p86, %p87
      %p89 = scmp.ne.s32.totalorder %s78, %s79
      %p90 = scmp.eq.s32.totalorder %s21, 0
      %p91 = por %p89, %p90
      %p92 = scmp.ne.s32.totalorder %s78, %s79
      %p93 = scmp.eq.s32.totalorder %s22, 1
      %p94 = por %p92, %p93
      %p96 = scmp.ne.s32.totalorder %s79, %s95
      %p97 = scmp.eq.s32.totalorder %s22, 0
      %p98 = por %p96, %p97
      %s99 = ssub.s32 %s24, %s38
      %p100 = scmp.eq.s32.totalorder %s99, 0
      %s102 = sadd.s32 %s101, 1
      %s103 = scalar_select %p100, %s101, %s102
      %p106 = pneg %p100
      %p107 = scmp.eq.s32.totalorder %s16, 1
      %p108 = por %p106, %p107
      %p109 = scmp.ne.s32.totalorder %s101, %s104
      %p110 = scmp.eq.s32.totalorder %s16, 0
      %p111 = por %p109, %p110
      %p112 = scmp.ne.s32.totalorder %s101, %s104
      %p113 = scmp.eq.s32.totalorder %s21, 1
      %p114 = por %p112, %p113
      %p115 = scmp.ne.s32.totalorder %s104, %s105
      %p116 = scmp.eq.s32.totalorder %s21, 0
      %p117 = por %p115, %p116
      %p118 = scmp.ne.s32.totalorder %s104, %s105
      %p119 = scmp.eq.s32.totalorder %s22, 1
      %p120 = por %p118, %p119
      %p122 = scmp.ne.s32.totalorder %s105, %s121
      %p123 = scmp.eq.s32.totalorder %s22, 0
      %p124 = por %p122, %p123
      %s125 = ssub.s32 %s23, %s42
      %s126 = ssub.s32 %s24, %s38
      %s127 = sor.u32 %s125, %s126
      %p128 = scmp.eq.s32.totalorder %s127, 0
      %s130 = sadd.s32 %s129, 1
      %s131 = scalar_select %p128, %s129, %s130
      %p134 = pneg %p128
      %p135 = scmp.eq.s32.totalorder %s16, 1
      %p136 = por %p134, %p135
      %p137 = scmp.ne.s32.totalorder %s129, %s132
      %p138 = scmp.eq.s32.totalorder %s16, 0
      %p139 = por %p137, %p138
      %p140 = scmp.ne.s32.totalorder %s129, %s132
      %p141 = scmp.eq.s32.totalorder %s21, 1
      %p142 = por %p140, %p141
      %p143 = scmp.ne.s32.totalorder %s132, %s133
      %p144 = scmp.eq.s32.totalorder %s21, 0
      %p145 = por %p143, %p144
      %p146 = scmp.ne.s32.totalorder %s132, %s133
      %p147 = scmp.eq.s32.totalorder %s22, 1
      %p148 = por %p146, %p147
      %p150 = scmp.ne.s32.totalorder %s133, %s149
      %p151 = scmp.eq.s32.totalorder %s22, 0
      %p152 = por %p150, %p151
      %p153 = scmp.le.s32.totalorder 1, %s16
      %p154 = scmp.lt.s32.totalorder %s16, 3
      %p155 = pnand %p153, %p154
      %p156 = pneg %p155
      // Predicated region
      $region9: #{tpu_custom_call.1} parent=5 // pred_check
        _
      $region10: #{tpu_custom_call.1} parent=5 // pred_check_branch
        %158 = sbr.rel (%p155) target = $region12
      $region11: #{tpu_custom_call.1} parent=5 // pred_region
        %s159 = ssub.s32 %s16, 1
        // Predicated region
        $region13: #{tpu_custom_call.1} parent=11 // pred_check
          %p160 = pneg %p63
        $region14: #{tpu_custom_call.1} parent=11 // pred_check_branch
          %162 = sbr.rel (%p160) target = $region16
        $region15: #{tpu_custom_call.1} parent=11 // pred_region
          %s163 = smul.u32 2, %s28
          %s165 = ssub.s32 128, 128
          %166 = vsyncadd [#allocation3], %s165
          %s167 = smul.addr %s26, 2
          %s168 = sadd.s32 %s163, %s167
          %s169 = smul.addr %s168, 64
          %s170 = scalar_lea.hbm %s0, %s169
          %s172 = sshll.u32 [#allocation2], 4
          %s173 = int_to_ptr.vmem [resolvable:$true] %s172
          %175 = dma.hbm_to_vmem [thread:$0]  %s170, 128, %s173, [#allocation3]
        $region16: #{tpu_custom_call.1} parent=11 // pred_fallthru
          _
      $region12: #{tpu_custom_call.1} parent=5 // pred_fallthru
        _
      %p176 = scmp.lt.s32.totalorder %s16, 2
      // Predicated region
      $region17: #{tpu_custom_call.1} parent=5 // pred_check
        %p177 = pneg %p176
      $region18: #{tpu_custom_call.1} parent=5 // pred_check_branch
        %179 = sbr.rel (%p177) target = $region20
      $region19: #{tpu_custom_call.1} parent=5 // pred_region
        // Predicated region
        $region21: #{tpu_custom_call.1} parent=19 // pred_check
          %p180 = pneg %p85
        $region22: #{tpu_custom_call.1} parent=19 // pred_check_branch
          %182 = sbr.rel (%p180) target = $region24
        $region23: #{tpu_custom_call.1} parent=19 // pred_region
          %s183 = sand.u32 %s75, 1
          %s184 = scalar_lea.sflag [#allocation6], %s183
          %s185 = sand.u32 %s75, 1
          %s186 = smul.addr %s185, 128
          %s187 = scalar_lea.vmem [#allocation5], %s186
          %s188 = smul.u32 16, %s24
          %s189 = smul.u32 2, %s25
          %s191 = ssub.s32 2048, 2048
          %192 = vsyncadd %s184, %s191
          %s193 = smul.addr %s188, 2
          %s194 = sadd.s32 %s189, %s193
          %s195 = smul.addr %s194, 64
          %s196 = scalar_lea.hbm %s1, %s195
          %s197 = sshll.u32 %s187, 4
          %s198 = int_to_ptr.vmem [resolvable:$true] %s197
          %203 = dma.hbm_to_vmem [thread:$0]  %s196, 2048, %s198, %s184, 128, 128, 8
        $region24: #{tpu_custom_call.1} parent=19 // pred_fallthru
          _
        // Predicated region
        $region25: #{tpu_custom_call.1} parent=19 // pred_check
          %p204 = pneg %p111
        $region26: #{tpu_custom_call.1} parent=19 // pred_check_branch
          %206 = sbr.rel (%p204) target = $region28
        $region27: #{tpu_custom_call.1} parent=19 // pred_region
          %p207 = scmp.lt.s32.totalorder %s24, 1
          %s208 = scalar_select %p207, %s24, 1
          %s209 = scalar_lea.vmem %s2, %s208
        $region28: #{tpu_custom_call.1} parent=19 // pred_fallthru
          _
      $region20: #{tpu_custom_call.1} parent=5 // pred_fallthru
        _
      %p210 = scmp.le.s32.totalorder 1, %s16
      %p211 = scmp.lt.s32.totalorder %s16, 3
      %p212 = pnand %p210, %p211
      %p213 = pneg %p212
      // Predicated region
      $region29: #{tpu_custom_call.1} parent=5 // pred_check
        _
      $region30: #{tpu_custom_call.1} parent=5 // pred_check_branch
        %215 = sbr.rel (%p212) target = $region32
      $region31: #{tpu_custom_call.1} parent=5 // pred_region
        %s216 = ssub.s32 %s16, 1
        // Predicated region
        $region33: #{tpu_custom_call.1} parent=31 // pred_check
          %p217 = pneg %p63
        $region34: #{tpu_custom_call.1} parent=31 // pred_check_branch
          %219 = sbr.rel (%p217) target = $region36
        $region35: #{tpu_custom_call.1} parent=31 // pred_region
          %220 = dma.done [#allocation3], 128
        $region36: #{tpu_custom_call.1} parent=31 // pred_fallthru
          _
        %s221 = sand.u32 %s78, 1
        %s222 = scalar_lea.sflag [#allocation6], %s221
        %s223 = sand.u32 %s78, 1
        %s224 = smul.addr %s223, 128
        %s225 = scalar_lea.vmem [#allocation5], %s224
        // Predicated region
        $region37: #{tpu_custom_call.1} parent=31 // pred_check
          %p226 = pneg %p91
        $region38: #{tpu_custom_call.1} parent=31 // pred_check_branch
          %228 = sbr.rel (%p226) target = $region40
        $region39: #{tpu_custom_call.1} parent=31 // pred_region
          %229 = dma.done %s222, 2048
        $region40: #{tpu_custom_call.1} parent=31 // pred_fallthru
          _
        %p230 = pneg %p63
        %p231 = pneg %p60
        %s232 = sand.u32 %s78, 1
        %s233 = scalar_lea.sflag [#allocation6], %s232
        %s234 = sand.u32 %s78, 1
        %s235 = smul.addr %s234, 128
        %s236 = scalar_lea.vmem [#allocation5], %s235
        %p237 = pneg %p91
        %p238 = pneg %p88
        %p239 = scmp.lt.s32.totalorder %s27, 1
        %s240 = scalar_select %p239, %s27, 1
        %s241 = scalar_lea.vmem %s2, %s240
        %p242 = pneg %p117
        %p243 = pneg %p114
        %p244 = pneg %p145
        %p245 = pneg %p142
        %s246 = sand.u32 %s132, 1
        %s247 = scalar_lea.sflag [#allocation4], %s246
        %s248 = sand.u32 %s132, 1
        %s249 = smul.addr %s248, 8
        %s250 = scalar_lea.vmem [#allocation7], %s249
        %s251 = smul.u32 2, %s28
        %s252 = smul.u32 16, %s27
        %s253 = smul.u32 2, %s28
        %p254 = scmp.lt.s32.totalorder %s27, 1
        %s255 = scalar_select %p254, %s27, 1
        %s256 = scalar_lea.vmem %s2, %s255
        %v258 = vld [vmem:[#allocation2] sm:$0xff]
        %v259 = vld [vmem:[%s225] sm:$0xff]
        %v260 = vld [vmem:[%s225 + $0x8] sm:$0xff]
        %v261 = vld [vmem:[%s225 + $0x10] sm:$0xff]
        %v262 = vld [vmem:[%s225 + $0x18] sm:$0xff]
        %v263 = vld [vmem:[%s225 + $0x20] sm:$0xff]
        %v264 = vld [vmem:[%s225 + $0x28] sm:$0xff]
        %v265 = vld [vmem:[%s225 + $0x30] sm:$0xff]
        %v266 = vld [vmem:[%s225 + $0x38] sm:$0xff]
        %v267 = vld [vmem:[%s225 + $0x40] sm:$0xff]
        %v268 = vld [vmem:[%s225 + $0x48] sm:$0xff]
        %v269 = vld [vmem:[%s225 + $0x50] sm:$0xff]
        %v270 = vld [vmem:[%s225 + $0x58] sm:$0xff]
        %v271 = vld [vmem:[%s225 + $0x60] sm:$0xff]
        %v272 = vld [vmem:[%s225 + $0x68] sm:$0xff]
        %v273 = vld [vmem:[%s225 + $0x70] sm:$0xff]
        %v274 = vld [vmem:[%s225 + $0x78] sm:$0xff]
        %v275 = vld [vmem:[%s256] sm:$0x1]
        %v277 = vlaneseq
        %v278 = vshrl.u32 %v277, 7
        %v279 = vsub.s32 0, %v278
        %v280 = vrot.slane %v275, %v279
        %v283 = vunpack.c.l.b16 %v258
        %v284 = vunpack.c.h.b16 %v258
        %v285 = vpack.c.b16 %v283, %v283
        %v286 = vpack.c.b16 %v284, %v284
        %v305 = vunpack.c.l.b16 %v259
        %v306 = vunpack.c.h.b16 %v259
        %v307 = vunpack.c.l.b16 %v260
        %v308 = vunpack.c.h.b16 %v260
        %v309 = vunpack.c.l.b16 %v261
        %v310 = vunpack.c.h.b16 %v261
        %v311 = vunpack.c.l.b16 %v262
        %v312 = vunpack.c.h.b16 %v262
        %v313 = vunpack.c.l.b16 %v263
        %v314 = vunpack.c.h.b16 %v263
        %v315 = vunpack.c.l.b16 %v264
        %v316 = vunpack.c.h.b16 %v264
        %v317 = vunpack.c.l.b16 %v265
        %v318 = vunpack.c.h.b16 %v265
        %v319 = vunpack.c.l.b16 %v266
        %v320 = vunpack.c.h.b16 %v266
        %v321 = vunpack.c.l.b16 %v267
        %v322 = vunpack.c.h.b16 %v267
        %v323 = vunpack.c.l.b16 %v268
        %v324 = vunpack.c.h.b16 %v268
        %v325 = vunpack.c.l.b16 %v269
        %v326 = vunpack.c.h.b16 %v269
        %v327 = vunpack.c.l.b16 %v270
        %v328 = vunpack.c.h.b16 %v270
        %v329 = vunpack.c.l.b16 %v271
        %v330 = vunpack.c.h.b16 %v271
        %v331 = vunpack.c.l.b16 %v272
        %v332 = vunpack.c.h.b16 %v272
        %v333 = vunpack.c.l.b16 %v273
        %v334 = vunpack.c.h.b16 %v273
        %v335 = vunpack.c.l.b16 %v274
        %v336 = vunpack.c.h.b16 %v274
        %v337 = vpack.c.b16 %v307, %v305
        %v338 = vpack.c.b16 %v308, %v306
        %v339 = vpack.c.b16 %v311, %v309
        %v340 = vpack.c.b16 %v312, %v310
        %v341 = vpack.c.b16 %v315, %v313
        %v342 = vpack.c.b16 %v316, %v314
        %v343 = vpack.c.b16 %v319, %v317
        %v344 = vpack.c.b16 %v320, %v318
        %v345 = vpack.c.b16 %v323, %v321
        %v346 = vpack.c.b16 %v324, %v322
        %v347 = vpack.c.b16 %v327, %v325
        %v348 = vpack.c.b16 %v328, %v326
        %v349 = vpack.c.b16 %v331, %v329
        %v350 = vpack.c.b16 %v332, %v330
        %v351 = vpack.c.b16 %v335, %v333
        %v352 = vpack.c.b16 %v336, %v334
        %369 = vmatprep.subr.bf16.mxu0 %v338
        %370 = vmatpush1.bf16.xpose.msra.mxu0 %v337
        %371 = vmatprep.subr.bf16.mxu0 %v340
        %372 = vmatpush1.bf16.xpose.msra.mxu0 %v339
        %373 = vmatprep.subr.bf16.mxu0 %v342
        %374 = vmatpush1.bf16.xpose.msra.mxu0 %v341
        %375 = vmatprep.subr.bf16.mxu0 %v344
        %376 = vmatpush1.bf16.xpose.msra.mxu0 %v343
        %377 = vmatprep.subr.bf16.mxu0 %v346
        %378 = vmatpush1.bf16.xpose.msra.mxu0 %v345
        %379 = vmatprep.subr.bf16.mxu0 %v348
        %380 = vmatpush1.bf16.xpose.msra.mxu0 %v347
        %381 = vmatprep.subr.bf16.mxu0 %v350
        %382 = vmatpush1.bf16.xpose.msra.mxu0 %v349
        %383 = vmatprep.subr.bf16.mxu0 %v352
        %384 = vmatpush1.bf16.xpose.msra.mxu0 %v351
        %385 = vmatprep.subr.bf16.mxu0 0
        %386 = vmatpush1.bf16.xpose.msra.mxu0 0
        %387 = vmatprep.subr.bf16.mxu0 0
        %388 = vmatpush1.bf16.xpose.msra.mxu0 0
        %389 = vmatprep.subr.bf16.mxu0 0
        %390 = vmatpush1.bf16.xpose.msra.mxu0 0
        %391 = vmatprep.subr.bf16.mxu0 0
        %392 = vmatpush1.bf16.xpose.msra.mxu0 0
        %393 = vmatprep.subr.bf16.mxu0 0
        %394 = vmatpush1.bf16.xpose.msra.mxu0 0
        %395 = vmatprep.subr.bf16.mxu0 0
        %396 = vmatpush1.bf16.xpose.msra.mxu0 0
        %397 = vmatprep.subr.bf16.mxu0 0
        %398 = vmatpush1.bf16.xpose.msra.mxu0 0
        %399 = vmatprep.subr.bf16.mxu0 0
        %400 = vmatpush1.bf16.xpose.msra.mxu0 0
        %401 = vmatprep.mubr.bf16.mxu0 %v286
        %402 = vmatmul.mubr.bf16.gmra.mrb[0].mxu0 %v285
        %v403 = vpop.f32.mrb[0].mxu0
        %v404 = vadd.f32 %v280, %v403
        %v405 = vpop.f32.mrb[0].mxu0
        %v406 = vpop.f32.mrb[0].mxu0
        %v407 = vpop.f32.mrb[0].mxu0
        %408 = vdwg.mxu0
        %v409 = vtanh.pop %v404
        %410 = vst [vmem:[%s250] sm:$0xff] %v409
        %s411 = sand.u32 %s132, 1
        %s412 = scalar_lea.sflag [#allocation4], %s411
        %s413 = sand.u32 %s132, 1
        %s414 = smul.addr %s413, 8
        %s415 = scalar_lea.vmem [#allocation7], %s414
        // Predicated region
        $region41: #{tpu_custom_call.1} parent=31 // pred_check
          %p416 = pneg %p142
        $region42: #{tpu_custom_call.1} parent=31 // pred_check_branch
          %418 = sbr.rel (%p416) target = $region44
        $region43: #{tpu_custom_call.1} parent=31 // pred_region
          %s420 = ssub.s32 128, 128
          %421 = vsyncadd %s412, %s420
          %s422 = smul.addr %s26, 2
          %s423 = sadd.s32 %s27, %s422
          %s424 = smul.addr %s423, 128
          %s425 = scalar_lea.hbm %s3, %s424
          %s427 = sshll.u32 %s415, 4
          %s428 = int_to_ptr.vmem [resolvable:$true] %s427
          %430 = dma.vmem_to_hbm [thread:$0]  %s428, 128, %s425, %s412
        $region44: #{tpu_custom_call.1} parent=31 // pred_fallthru
          _
      $region32: #{tpu_custom_call.1} parent=5 // pred_fallthru
        _
      %p431 = scmp.le.s32.totalorder 2, %s16
      // Predicated region
      $region45: #{tpu_custom_call.1} parent=5 // pred_check
        %p432 = pneg %p431
      $region46: #{tpu_custom_call.1} parent=5 // pred_check_branch
        %434 = sbr.rel (%p432) target = $region48
      $region47: #{tpu_custom_call.1} parent=5 // pred_region
        %s435 = ssub.s32 %s16, 2
        // Predicated region
        $region49: #{tpu_custom_call.1} parent=47 // pred_check
          %p436 = pneg %p148
        $region50: #{tpu_custom_call.1} parent=47 // pred_check_branch
          %438 = sbr.rel (%p436) target = $region52
        $region51: #{tpu_custom_call.1} parent=47 // pred_region
          %s439 = sand.u32 %s133, 1
          %s440 = scalar_lea.sflag [#allocation4], %s439
          %s441 = sand.u32 %s133, 1
          %s442 = smul.addr %s441, 8
          %s443 = scalar_lea.vmem [#allocation7], %s442
          %444 = dma.done %s440, 128
        $region52: #{tpu_custom_call.1} parent=47 // pred_fallthru
          _
      $region48: #{tpu_custom_call.1} parent=5 // pred_fallthru
        _
    $region6: #{tpu_custom_call.1} parent=1 // loop_footer
      %s20 = sadd.s32 1, %s16
    $region7: #{tpu_custom_call.1} parent=1 // loop_footer_branch
      %15 = sbr.rel target = $region3
    $region8: #{tpu_custom_call.1} parent=1 // loop_exit
      _
    %445 = vsyncpa [#allocation3], 1
    %s446 = scalar_lea.sflag [#allocation3], 1
    %447 = vsyncpa %s446, 1
    %448 = vsyncpa [#allocation6], 1
    %s449 = scalar_lea.sflag [#allocation6], 1
    %450 = vsyncpa %s449, 1
    %451 = vsyncpa [#allocation4], 1
    %s452 = scalar_lea.sflag [#allocation4], 1
    %453 = vsyncpa %s452, 1

</llo_original>
